<compile_context>
chip_gen: v7x
topology: tpu7x:2x2x1
jax: 0.10.0
libtpu: 0.0.40
codegen_flags: <defaults>
</compile_context>

<pallas_src>
import math

import jax
import jax.numpy as jnp
from jax.experimental import pallas as pl
from jax.experimental.pallas import tpu as pltpu


def _round_up(x, m):
    return (x + m - 1) // m * m


def _acct_bytes(rows, cols, itemsize):
    """VMEM footprint of a (rows, cols) tile after (sublane, lane) layout padding."""
    itemsize = int(itemsize)
    sublane = max(8, 32 // max(itemsize, 1))   # 8 for f32, 16 for bf16, 32 for int8
    return _round_up(int(rows), sublane) * _round_up(int(cols), 128) * itemsize


def _make_fnn_kernel(num_penult, compute_dtype, with_emb):
    """Kernel for `num_penult` penultimate Linear layers + final Linear."""

    def kernel(*refs):
        # refs: [x, (w_i, b_i)*num_penult, w_last, b_last, logits_out(, emb_out)]
        x_ref = refs[0]
        layer_refs = refs[1:1 + 2 * num_penult]
        wl_ref = refs[1 + 2 * num_penult]
        bl_ref = refs[2 + 2 * num_penult]
        logits_ref = refs[3 + 2 * num_penult]
        emb_ref = refs[4 + 2 * num_penult] if with_emb else None

        # x / weights arrive already in compute_dtype (cast once in the wrapper).
        h = x_ref[...]
        if h.dtype != compute_dtype:
            h = h.astype(compute_dtype)

        acc = None
        for i in range(num_penult):
            w = layer_refs[2 * i][...]                         # compute dtype
            b = layer_refs[2 * i + 1][...].astype(jnp.float32)  # f32 bias
            acc = jnp.dot(h, w, preferred_element_type=jnp.float32) + b
            if i == 0:
                # Single surviving ReLU (see semantics note at top of file).
                acc = jnp.maximum(acc, 0.0)
            h = acc.astype(compute_dtype)

        if emb_ref is not None:
            emb_ref[...] = acc.astype(emb_ref.dtype)           # full-precision emb

        logits = jnp.dot(h, wl_ref[...], preferred_element_type=jnp.float32)
        logits = logits + bl_ref[...].astype(jnp.float32)
        logits_ref[...] = logits.astype(logits_ref.dtype)

    return kernel


def fnn_forward(x, penult_params, last_params, last=True,
                matmul_dtype=None, out_dtype=None):
    """Pallas TPU equivalent of FNN.forward(x, last=last).

    x: (batch, in_dim) array.
    penult_params: list of (W, b), W: (in, out), b: (1, out) or (out,).
    last_params: (W_last, b_last).
    matmul_dtype: MXU-operand dtype.  Default: bf16 when x is f32 (f32 accumulate).
                  Pass jnp.float32 to force f32 operands.
    out_dtype: output dtype for logits/emb (default: x.dtype).
    Returns (logits, emb) if last else logits.
    """
    # TODO(synk): `freeze=True` (torch.no_grad) has no forward-pass equivalent here.
    num_penult = len(penult_params)
    assert num_penult >= 1, "FNN requires at least hidden_dims[0:2]"
    batch, in_dim = x.shape
    wl, bl = last_params
    emb_dim, num_classes = wl.shape
    assert penult_params[-1][0].shape[1] == emb_dim

    if matmul_dtype is not None:
        compute_dtype = jnp.dtype(matmul_dtype)
    elif jnp.dtype(x.dtype) == jnp.dtype(jnp.float32):
        compute_dtype = jnp.dtype(jnp.bfloat16)      # native MXU rate, f32 accumulate
    else:
        compute_dtype = jnp.dtype(x.dtype)
    out_dtype = jnp.dtype(out_dtype) if out_dtype is not None else jnp.dtype(x.dtype)

    c_isz = compute_dtype.itemsize
    o_isz = out_dtype.itemsize

    # Pre-cast weights to the compute dtype, biases to f32 (shape (1, out)).
    cast_layers = [(jnp.asarray(w).astype(compute_dtype),
                    jnp.asarray(b).astype(jnp.float32).reshape(1, -1))
                   for (w, b) in penult_params]
    wl_c = jnp.asarray(wl).astype(compute_dtype)
    bl_c = jnp.asarray(bl).astype(jnp.float32).reshape(1, -1)

    dims = [in_dim] + [w.shape[1] for w, _ in cast_layers] + [num_classes]

    # ---- per-generation VMEM budget -----------------------------------------
    try:
        vmem_cap = int(pltpu.get_tpu_info().vmem_capacity_bytes)
    except Exception:
        vmem_cap = 64 << 20                 # safe floor (v7x per-TC capacity)
    limit_cap = (vmem_cap * 3) // 4         # 96 MiB on v5e/v6e, 48 MiB on v7x
    budget = max(limit_cap - (4 << 20), 8 << 20)

    # VMEM accounting: double-buffered weight/bias blocks + double-buffered
    # activation I/O tiles + live f32 intermediates (acc + cast copy + scratch).
    weight_acct = sum(_acct_bytes(w.shape[0], w.shape[1], c_isz)
                      + _acct_bytes(1, b.shape[1], 4)
                      for w, b in cast_layers)
    weight_acct += _acct_bytes(wl_c.shape[0], wl_c.shape[1], c_isz)
    weight_acct += _acct_bytes(1, bl_c.shape[1], 4)
    max_dim = max(dims)

    def vmem_estimate(tb):
        io = 2 * (_acct_bytes(tb, in_dim, c_isz)
                  + _acct_bytes(tb, num_classes, o_isz)
                  + (_acct_bytes(tb, emb_dim, o_isz) if last else 0))
        interm = 3 * _acct_bytes(tb, max_dim, 4)
        return 2 * weight_acct + io + interm

    # ---- batch tile selection -------------------------------------------------
    b8 = _round_up(batch, 8)
    cands = [c for c in (4096, 3072, 2048, 1536, 1024, 768, 512, 384,
                         256, 192, 128, 96, 64, 48, 32, 24, 16, 8) if c <= b8]
    if not cands:
        cands = [8]

    tb = None
    for cand in cands:                       # largest first
        bp = _round_up(b8, cand)
        if (bp - b8) * 4 > b8:               # reject > 25% batch-padding waste
            continue
        if b8 >= 16 and bp // cand < 2:      # keep >= 2 grid steps (v7x: 2 TCs)
            continue
        if vmem_estimate(cand) > budget:
            continue
        tb = cand
        break
    if tb is None:
        # TODO(synk): stream weights per layer / per K-block with a nested
        # pltpu.emit_pipeline when they exceed the VMEM budget instead of
        # shrinking the batch tile; for now fall back to the smallest tile.
        tb = min(cands)
    batch_p = _round_up(b8, tb)

    # ---- input prep: single wrapper-side cast; pad ONLY the batch axis.
    x_in = x if jnp.dtype(x.dtype) == compute_dtype else x.astype(compute_dtype)
    if batch_p != batch:
        x_in = jnp.pad(x_in, ((0, batch_p - batch), (0, 0)))

    # ---- specs: all feature dims use full-array block extents (no padding).
    inputs = [x_in]
    in_specs = [pl.BlockSpec((tb, in_dim), lambda i: (i, 0))]
    for w, b in cast_layers:
        inputs += [w, b]
        in_specs += [pl.BlockSpec(w.shape, lambda i: (0, 0)),   # VMEM-resident
                     pl.BlockSpec(b.shape, lambda i: (0, 0))]
    inputs += [wl_c, bl_c]
    in_specs += [pl.BlockSpec(wl_c.shape, lambda i: (0, 0)),
                 pl.BlockSpec(bl_c.shape, lambda i: (0, 0))]

    if last:
        out_shape = (jax.ShapeDtypeStruct((batch_p, num_classes), out_dtype),
                     jax.ShapeDtypeStruct((batch_p, emb_dim), out_dtype))
        out_specs = (pl.BlockSpec((tb, num_classes), lambda i: (i, 0)),
                     pl.BlockSpec((tb, emb_dim), lambda i: (i, 0)))
    else:
        out_shape = jax.ShapeDtypeStruct((batch_p, num_classes), out_dtype)
        out_specs = pl.BlockSpec((tb, num_classes), lambda i: (i, 0))

    flops = 2 * batch_p * sum(a * b for a, b in zip(dims[:-1], dims[1:]))
    bytes_accessed = (batch_p * in_dim * c_isz
                      + sum(w.size * c_isz + b.size * 4 for w, b in cast_layers)
                      + wl_c.size * c_isz + bl_c.size * 4
                      + batch_p * (num_classes + (emb_dim if last else 0)) * o_isz)

    vmem_est = vmem_estimate(tb)
    vmem_limit = int(min(limit_cap, max(2 * vmem_est, 32 << 20)))

    result = pl.pallas_call(
        _make_fnn_kernel(num_penult, compute_dtype, with_emb=last),
        out_shape=out_shape,
        grid=(batch_p // tb,),
        in_specs=in_specs,
        out_specs=out_specs,
        compiler_params=pltpu.CompilerParams(
            dimension_semantics=("parallel",),
            vmem_limit_bytes=vmem_limit),
        cost_estimate=pl.CostEstimate(flops=flops, transcendentals=0,
                                      bytes_accessed=bytes_accessed),
    )(*inputs)

    if last:
        logits, emb = result
        if batch_p != batch:
            logits, emb = logits[:batch], emb[:batch]
        return logits, emb
    logits = result
    if batch_p != batch:
        logits = logits[:batch]
    return logits


if __name__ == "__main__":
    # hidden_dims = [input_dim, hidden_1]; num_classes for the last layer.
    hidden_dims = [32, 64]
    num_classes = 10
    batch = 32

    key = jax.random.PRNGKey(0)
    keys = jax.random.split(key, 2 * len(hidden_dims) + 4)

    x = jax.random.normal(keys[0], (batch, hidden_dims[0]), dtype=jnp.float32)

    # Deterministic PyTorch-style uniform(-1/sqrt(fan_in), 1/sqrt(fan_in)) init.
    penult_params = []
    prev = hidden_dims[0]
    ki = 1
    for hdim in hidden_dims[1:]:
        bound = 1.0 / math.sqrt(prev)
        w = jax.random.uniform(keys[ki], (prev, hdim), jnp.float32, -bound, bound)
        ki += 1
        b = jax.random.uniform(keys[ki], (1, hdim), jnp.float32, -bound, bound)
        ki += 1
        penult_params.append((w, b))
        prev = hdim

    bound = 1.0 / math.sqrt(prev)
    w_last = jax.random.uniform(keys[ki], (prev, num_classes), jnp.float32, -bound, bound)
    ki += 1
    b_last = jax.random.uniform(keys[ki], (1, num_classes), jnp.float32, -bound, bound)

    # Pure-JAX reference (single ReLU after the first Linear — matches nn.Sequential
    # name-collision semantics of the PyTorch module).
    h = x
    for i, (w, b) in enumerate(penult_params):
        h = h @ w + b
        if i == 0:
            h = jnp.maximum(h, 0.0)
    ref_emb = h
    ref_logits = h @ w_last + b_last

    # 1) exact f32 MXU-operand path, last=True -> (logits, emb)
    logits, emb = fnn_forward(x, penult_params, (w_last, b_last), last=True,
                              matmul_dtype=jnp.float32)
    jax.block_until_ready((logits, emb))
    assert logits.shape == (batch, num_classes) and emb.shape == (batch, prev)
    assert jnp.allclose(emb, ref_emb, atol=1e-5, rtol=1e-5)
    assert jnp.allclose(logits, ref_logits, atol=1e-5, rtol=1e-5)

    # 2) default path: bf16 MXU operands, f32 accumulation — loose tolerance.
    logits_bf, emb_bf = fnn_forward(x, penult_params, (w_last, b_last), last=True)
    jax.block_until_ready((logits_bf, emb_bf))
    assert jnp.allclose(logits_bf, ref_logits, atol=1e-1, rtol=1e-1)
    assert jnp.allclose(emb_bf, ref_emb, atol=1e-1, rtol=1e-1)

    # 3) last=False path: no emb output is allocated or written.
    logits_only = fnn_forward(x, penult_params, (w_last, b_last), last=False)
    jax.block_until_ready(logits_only)
    assert logits_only.shape == (batch, num_classes)
    assert jnp.allclose(logits_only, ref_logits, atol=1e-1, rtol=1e-1)

    # 4) ragged batch (exercises batch padding + slice), exact f32 path.
    x5 = x[:5]
    logits5 = fnn_forward(x5, penult_params, (w_last, b_last), last=False,
                          matmul_dtype=jnp.float32)
    jax.block_until_ready(logits5)
    assert logits5.shape == (5, num_classes)
    assert jnp.allclose(logits5, ref_logits[:5], atol=1e-5, rtol=1e-5)

    # 5) bf16 outputs via the out_dtype knob.
    logits_o16, emb_o16 = fnn_forward(x, penult_params, (w_last, b_last), last=True,
                                      out_dtype=jnp.bfloat16)
    jax.block_until_ready((logits_o16, emb_o16))
    assert logits_o16.dtype == jnp.bfloat16 and emb_o16.dtype == jnp.bfloat16
    assert jnp.allclose(logits_o16.astype(jnp.float32), ref_logits, atol=2e-1, rtol=2e-1)

    print("KERNEL_OK")
</pallas_src>

<mosaic_0001>
module attributes {stable_mosaic.version = 11 : i64} {
  func.func @kernel(%arg0: i32, %arg1: memref<16x32xf32, #tpu.memory_space<vmem>>, %arg2: memref<32x64xf32, #tpu.memory_space<vmem>>, %arg3: memref<1x64xf32, #tpu.memory_space<vmem>>, %arg4: memref<64x10xf32, #tpu.memory_space<vmem>>, %arg5: memref<1x10xf32, #tpu.memory_space<vmem>>, %arg6: memref<16x10xf32, #tpu.memory_space<vmem>>, %arg7: memref<16x64xf32, #tpu.memory_space<vmem>>) attributes {dimension_semantics = [#tpu.dimension_semantics<parallel>], iteration_bounds = array<i64: 2>, scalar_prefetch = 0 : i64, scratch_operands = 0 : i64, tpu.core_type = #tpu.core_type<tc>, window_params = [{transform_indices = @transform_0, window_bounds = array<i64: 16, 32>}, {pipeline_mode = #tpu.pipeline_mode<synchronous>, transform_indices = @transform_1, window_bounds = array<i64: 32, 64>}, {pipeline_mode = #tpu.pipeline_mode<synchronous>, transform_indices = @transform_2, window_bounds = array<i64: 1, 64>}, {pipeline_mode = #tpu.pipeline_mode<synchronous>, transform_indices = @transform_3, window_bounds = array<i64: 64, 10>}, {pipeline_mode = #tpu.pipeline_mode<synchronous>, transform_indices = @transform_4, window_bounds = array<i64: 1, 10>}, {transform_indices = @transform_5, window_bounds = array<i64: 16, 10>}, {transform_indices = @transform_6, window_bounds = array<i64: 16, 64>}]} {
    %c0 = arith.constant 0 : index
    %c0_0 = arith.constant 0 : index
    %0 = vector.load %arg1[%c0, %c0_0] : memref<16x32xf32, #tpu.memory_space<vmem>>, vector<16x32xf32>
    %c0_1 = arith.constant 0 : index
    %c0_2 = arith.constant 0 : index
    %1 = vector.load %arg2[%c0_1, %c0_2] : memref<32x64xf32, #tpu.memory_space<vmem>>, vector<32x64xf32>
    %c0_3 = arith.constant 0 : index
    %c0_4 = arith.constant 0 : index
    %2 = vector.load %arg3[%c0_3, %c0_4] : memref<1x64xf32, #tpu.memory_space<vmem>>, vector<1x64xf32>
    %cst = arith.constant dense<0.000000e+00> : vector<16x64xf32>
    %3 = tpu.matmul %0, %1, %cst {dimension_numbers = #tpu.dot_dimension_numbers<[1], [0], [0], [1], [0, 0, 1, 1], [], []>} : vector<16x32xf32>, vector<32x64xf32>, vector<16x64xf32> -> vector<16x64xf32>
    %4 = vector.broadcast %2 : vector<1x64xf32> to vector<16x64xf32>
    %5 = arith.addf %3, %4 : vector<16x64xf32>
    %cst_5 = arith.constant 0.000000e+00 : f32
    %6 = vector.broadcast %cst_5 : f32 to vector<16x64xf32>
    %7 = arith.maximumf %5, %6 : vector<16x64xf32>
    %c0_6 = arith.constant 0 : index
    %c0_7 = arith.constant 0 : index
    %8 = vector.load %arg7[%c0_6, %c0_7] : memref<16x64xf32, #tpu.memory_space<vmem>>, vector<16x64xf32>
    tpu.vector_store %arg7[%c0_6, %c0_7], %7 {strides = array<i32>} : memref<16x64xf32, #tpu.memory_space<vmem>>, vector<16x64xf32>,
    %c0_8 = arith.constant 0 : index
    %c0_9 = arith.constant 0 : index
    %9 = vector.load %arg4[%c0_8, %c0_9] : memref<64x10xf32, #tpu.memory_space<vmem>>, vector<64x10xf32>
    %cst_10 = arith.constant dense<0.000000e+00> : vector<16x10xf32>
    %10 = tpu.matmul %7, %9, %cst_10 {dimension_numbers = #tpu.dot_dimension_numbers<[1], [0], [0], [1], [0, 0, 1, 1], [], []>} : vector<16x64xf32>, vector<64x10xf32>, vector<16x10xf32> -> vector<16x10xf32>
    %c0_11 = arith.constant 0 : index
    %c0_12 = arith.constant 0 : index
    %11 = vector.load %arg5[%c0_11, %c0_12] : memref<1x10xf32, #tpu.memory_space<vmem>>, vector<1x10xf32>
    %12 = vector.broadcast %11 : vector<1x10xf32> to vector<16x10xf32>
    %13 = arith.addf %10, %12 : vector<16x10xf32>
    %c0_13 = arith.constant 0 : index
    %c0_14 = arith.constant 0 : index
    %14 = vector.load %arg6[%c0_13, %c0_14] : memref<16x10xf32, #tpu.memory_space<vmem>>, vector<16x10xf32>
    tpu.vector_store %arg6[%c0_13, %c0_14], %13 {strides = array<i32>} : memref<16x10xf32, #tpu.memory_space<vmem>>, vector<16x10xf32>,
    return
  }
  func.func @transform_0(%arg0: i32) -> (i32, i32) {
    %c0_i32 = arith.constant 0 : i32
    %c0_i32_0 = arith.constant 0 : i32
    return %arg0, %c0_i32 : i32, i32
  }
  func.func @transform_1(%arg0: i32) -> (i32, i32) {
    %c0_i32 = arith.constant 0 : i32
    %c0_i32_0 = arith.constant 0 : i32
    %c0_i32_1 = arith.constant 0 : i32
    return %c0_i32, %c0_i32_0 : i32, i32
  }
  func.func @transform_2(%arg0: i32) -> (i32, i32) {
    %c0_i32 = arith.constant 0 : i32
    %c0_i32_0 = arith.constant 0 : i32
    %c0_i32_1 = arith.constant 0 : i32
    return %c0_i32, %c0_i32_0 : i32, i32
  }
  func.func @transform_3(%arg0: i32) -> (i32, i32) {
    %c0_i32 = arith.constant 0 : i32
    %c0_i32_0 = arith.constant 0 : i32
    %c0_i32_1 = arith.constant 0 : i32
    return %c0_i32, %c0_i32_0 : i32, i32
  }
  func.func @transform_4(%arg0: i32) -> (i32, i32) {
    %c0_i32 = arith.constant 0 : i32
    %c0_i32_0 = arith.constant 0 : i32
    %c0_i32_1 = arith.constant 0 : i32
    return %c0_i32, %c0_i32_0 : i32, i32
  }
  func.func @transform_5(%arg0: i32) -> (i32, i32) {
    %c0_i32 = arith.constant 0 : i32
    %c0_i32_0 = arith.constant 0 : i32
    return %arg0, %c0_i32 : i32, i32
  }
  func.func @transform_6(%arg0: i32) -> (i32, i32) {
    %c0_i32 = arith.constant 0 : i32
    %c0_i32_0 = arith.constant 0 : i32
    return %arg0, %c0_i32 : i32, i32
  }
}

</mosaic_0001>

<llo_original>
// kernel: tpu_custom_call.1
$region0: #{tpu_custom_call.1}
  #allocation0 [shape = 'u32[]', space=smem, size = 0x4, offset = 0x4, fixed_abs, tag = 'smem constant byte address 0x4 - core index']
  #allocation1 [shape = 'u32[144,128]{1,0:T(1,128)}', space=vmem, size = 0x12000, scoped, tag = 'internal scratch']
  %s0 = inlined_call_operand.vmem [shape: f32[32,32], index: 0, kind: input, shape index: {}]
  %s1 = inlined_call_operand.vmem [shape: f32[32,64], index: 1, kind: input, shape index: {}]
  %s2 = inlined_call_operand.vmem [shape: f32[1,64], index: 2, kind: input, shape index: {}]
  %s3 = inlined_call_operand.vmem [shape: f32[64,10], index: 3, kind: input, shape index: {}]
  %s4 = inlined_call_operand.vmem [shape: f32[1,10], index: 4, kind: input, shape index: {}]
  %s5 = inlined_call_operand.vmem [shape: f32[32,10], index: 5, kind: output, shape index: {0}]
  %s6 = inlined_call_operand.hbm [shape: f32[32,64], index: 6, kind: output, shape index: {1}]
  %7 = xla_tuple %s5, %s6
  %s8 = sld [smem:[#allocation0]]
  $region61: #{tpu_custom_call.1} parent=0
    _
  %s10 = ssub.s32 1, %s8
  %s11 = scalar_select 0, %s10, %s8
  $region1: #{tpu_custom_call.1} parent=0
    #allocation2 [shape = 'u8[16384]{0}', space=vmem, size = 0x4000, scoped, tag = 'output window, operand 1']
    #allocation3 [shape = 's32[2]{0}', space=sflag, size = 0x8, scoped, tag = 'scoped memory for tpu_custom_call.1']
    %12 = vsyncpa [#allocation3], 0
    %s13 = scalar_lea.sflag [#allocation3], 1
    %14 = vsyncpa %s13, 0
    loop: start=0, step=1, limit=4
    $region2: #{tpu_custom_call.1} parent=1 // loop_pre_header
      _
    $region3: #{tpu_custom_call.1} parent=1 // loop_header
      %s16 = sphi 0, %s20
      %p17 = scmp.ge.s32.totalorder %s16, 4
      %s26 = sphi 0, %s28
      %s29 = sphi 0, %s26
      %s30 = sphi 0, %s29
      %s46 = sphi 0, %s30
      %s50 = sphi 0, %s50
      %s52 = sphi 0, %s50
      %s53 = sphi 0, %s52
      %s67 = sphi 0, %s53
      %s71 = sphi 0, %s71
      %s73 = sphi 0, %s71
      %s74 = sphi 0, %s73
      %s88 = sphi 0, %s74
      %s92 = sphi 0, %s92
      %s94 = sphi 0, %s92
      %s95 = sphi 0, %s94
      %s109 = sphi 0, %s95
      %s113 = sphi 0, %s113
      %s115 = sphi 0, %s113
      %s116 = sphi 0, %s115
      %s130 = sphi 0, %s116
      %s136 = sphi 0, %s138
      %s139 = sphi 0, %s136
      %s140 = sphi 0, %s139
      %s156 = sphi 0, %s140
      %s162 = sphi 0, %s164
      %s165 = sphi 0, %s162
      %s166 = sphi 0, %s165
      %s182 = sphi 0, %s166
    $region4: #{tpu_custom_call.1} parent=1 // loop_header_branch
      %19 = sbr.rel (%p17) target = $region8
    $region5: #{tpu_custom_call.1} parent=1 // loop_body
      %s21 = ssub.s32 %s16, 1
      %s22 = ssub.s32 %s16, 2
      %s23 = sadd.s32 %s16, 1
      %s24 = ssub.s32 %s16, %s23
      %p25 = scmp.eq.s32.totalorder %s24, 0
      %s27 = sadd.s32 %s26, 1
      %s28 = scalar_select %p25, %s26, %s27
      %p31 = pneg %p25
      %p32 = scmp.eq.s32.totalorder %s16, 1
      %p33 = por %p31, %p32
      %p34 = scmp.ne.s32.totalorder %s26, %s29
      %p35 = scmp.eq.s32.totalorder %s16, 0
      %p36 = por %p34, %p35
      %p37 = scmp.ne.s32.totalorder %s26, %s29
      %p38 = scmp.eq.s32.totalorder %s21, 1
      %p39 = por %p37, %p38
      %p40 = scmp.ne.s32.totalorder %s29, %s30
      %p41 = scmp.eq.s32.totalorder %s21, 0
      %p42 = por %p40, %p41
      %p43 = scmp.ne.s32.totalorder %s29, %s30
      %p44 = scmp.eq.s32.totalorder %s22, 1
      %p45 = por %p43, %p44
      %p47 = scmp.ne.s32.totalorder %s30, %s46
      %p48 = scmp.eq.s32.totalorder %s22, 0
      %p49 = por %p47, %p48
      %s51 = sadd.s32 %s50, 1
      %p54 = scmp.eq.s32.totalorder %s16, 1
      %p55 = scmp.ne.s32.totalorder %s50, %s52
      %p56 = scmp.eq.s32.totalorder %s16, 0
      %p57 = por %p55, %p56
      %p58 = scmp.ne.s32.totalorder %s50, %s52
      %p59 = scmp.eq.s32.totalorder %s21, 1
      %p60 = por %p58, %p59
      %p61 = scmp.ne.s32.totalorder %s52, %s53
      %p62 = scmp.eq.s32.totalorder %s21, 0
      %p63 = por %p61, %p62
      %p64 = scmp.ne.s32.totalorder %s52, %s53
      %p65 = scmp.eq.s32.totalorder %s22, 1
      %p66 = por %p64, %p65
      %p68 = scmp.ne.s32.totalorder %s53, %s67
      %p69 = scmp.eq.s32.totalorder %s22, 0
      %p70 = por %p68, %p69
      %s72 = sadd.s32 %s71, 1
      %p75 = scmp.eq.s32.totalorder %s16, 1
      %p76 = scmp.ne.s32.totalorder %s71, %s73
      %p77 = scmp.eq.s32.totalorder %s16, 0
      %p78 = por %p76, %p77
      %p79 = scmp.ne.s32.totalorder %s71, %s73
      %p80 = scmp.eq.s32.totalorder %s21, 1
      %p81 = por %p79, %p80
      %p82 = scmp.ne.s32.totalorder %s73, %s74
      %p83 = scmp.eq.s32.totalorder %s21, 0
      %p84 = por %p82, %p83
      %p85 = scmp.ne.s32.totalorder %s73, %s74
      %p86 = scmp.eq.s32.totalorder %s22, 1
      %p87 = por %p85, %p86
      %p89 = scmp.ne.s32.totalorder %s74, %s88
      %p90 = scmp.eq.s32.totalorder %s22, 0
      %p91 = por %p89, %p90
      %s93 = sadd.s32 %s92, 1
      %p96 = scmp.eq.s32.totalorder %s16, 1
      %p97 = scmp.ne.s32.totalorder %s92, %s94
      %p98 = scmp.eq.s32.totalorder %s16, 0
      %p99 = por %p97, %p98
      %p100 = scmp.ne.s32.totalorder %s92, %s94
      %p101 = scmp.eq.s32.totalorder %s21, 1
      %p102 = por %p100, %p101
      %p103 = scmp.ne.s32.totalorder %s94, %s95
      %p104 = scmp.eq.s32.totalorder %s21, 0
      %p105 = por %p103, %p104
      %p106 = scmp.ne.s32.totalorder %s94, %s95
      %p107 = scmp.eq.s32.totalorder %s22, 1
      %p108 = por %p106, %p107
      %p110 = scmp.ne.s32.totalorder %s95, %s109
      %p111 = scmp.eq.s32.totalorder %s22, 0
      %p112 = por %p110, %p111
      %s114 = sadd.s32 %s113, 1
      %p117 = scmp.eq.s32.totalorder %s16, 1
      %p118 = scmp.ne.s32.totalorder %s113, %s115
      %p119 = scmp.eq.s32.totalorder %s16, 0
      %p120 = por %p118, %p119
      %p121 = scmp.ne.s32.totalorder %s113, %s115
      %p122 = scmp.eq.s32.totalorder %s21, 1
      %p123 = por %p121, %p122
      %p124 = scmp.ne.s32.totalorder %s115, %s116
      %p125 = scmp.eq.s32.totalorder %s21, 0
      %p126 = por %p124, %p125
      %p127 = scmp.ne.s32.totalorder %s115, %s116
      %p128 = scmp.eq.s32.totalorder %s22, 1
      %p129 = por %p127, %p128
      %p131 = scmp.ne.s32.totalorder %s116, %s130
      %p132 = scmp.eq.s32.totalorder %s22, 0
      %p133 = por %p131, %p132
      %s134 = ssub.s32 %s16, %s23
      %p135 = scmp.eq.s32.totalorder %s134, 0
      %s137 = sadd.s32 %s136, 1
      %s138 = scalar_select %p135, %s136, %s137
      %p141 = pneg %p135
      %p142 = scmp.eq.s32.totalorder %s16, 1
      %p143 = por %p141, %p142
      %p144 = scmp.ne.s32.totalorder %s136, %s139
      %p145 = scmp.eq.s32.totalorder %s16, 0
      %p146 = por %p144, %p145
      %p147 = scmp.ne.s32.totalorder %s136, %s139
      %p148 = scmp.eq.s32.totalorder %s21, 1
      %p149 = por %p147, %p148
      %p150 = scmp.ne.s32.totalorder %s139, %s140
      %p151 = scmp.eq.s32.totalorder %s21, 0
      %p152 = por %p150, %p151
      %p153 = scmp.ne.s32.totalorder %s139, %s140
      %p154 = scmp.eq.s32.totalorder %s22, 1
      %p155 = por %p153, %p154
      %p157 = scmp.ne.s32.totalorder %s140, %s156
      %p158 = scmp.eq.s32.totalorder %s22, 0
      %p159 = por %p157, %p158
      %s160 = ssub.s32 %s16, %s23
      %p161 = scmp.eq.s32.totalorder %s160, 0
      %s163 = sadd.s32 %s162, 1
      %s164 = scalar_select %p161, %s162, %s163
      %p167 = pneg %p161
      %p168 = scmp.eq.s32.totalorder %s16, 1
      %p169 = por %p167, %p168
      %p170 = scmp.ne.s32.totalorder %s162, %s165
      %p171 = scmp.eq.s32.totalorder %s16, 0
      %p172 = por %p170, %p171
      %p173 = scmp.ne.s32.totalorder %s162, %s165
      %p174 = scmp.eq.s32.totalorder %s21, 1
      %p175 = por %p173, %p174
      %p176 = scmp.ne.s32.totalorder %s165, %s166
      %p177 = scmp.eq.s32.totalorder %s21, 0
      %p178 = por %p176, %p177
      %p179 = scmp.ne.s32.totalorder %s165, %s166
      %p180 = scmp.eq.s32.totalorder %s22, 1
      %p181 = por %p179, %p180
      %p183 = scmp.ne.s32.totalorder %s166, %s182
      %p184 = scmp.eq.s32.totalorder %s22, 0
      %p185 = por %p183, %p184
      %p186 = scmp.le.s32.totalorder 1, %s16
      %p187 = scmp.lt.s32.totalorder %s16, 3
      %p188 = pnand %p186, %p187
      %p189 = pneg %p188
      // Predicated region
      $region9: #{tpu_custom_call.1} parent=5 // pred_check
        _
      $region10: #{tpu_custom_call.1} parent=5 // pred_check_branch
        %191 = sbr.rel (%p188) target = $region12
      $region11: #{tpu_custom_call.1} parent=5 // pred_region
        %s192 = ssub.s32 %s16, 1
        // Predicated region
        $region13: #{tpu_custom_call.1} parent=11 // pred_check
          %p193 = pneg %p63
        $region14: #{tpu_custom_call.1} parent=11 // pred_check_branch
          %195 = sbr.rel (%p193) target = $region16
        $region15: #{tpu_custom_call.1} parent=11 // pred_region
          _
        $region16: #{tpu_custom_call.1} parent=11 // pred_fallthru
          _
        // Predicated region
        $region17: #{tpu_custom_call.1} parent=11 // pred_check
          %p196 = pneg %p84
        $region18: #{tpu_custom_call.1} parent=11 // pred_check_branch
          %198 = sbr.rel (%p196) target = $region20
        $region19: #{tpu_custom_call.1} parent=11 // pred_region
          _
        $region20: #{tpu_custom_call.1} parent=11 // pred_fallthru
          _
        // Predicated region
        $region21: #{tpu_custom_call.1} parent=11 // pred_check
          %p199 = pneg %p105
        $region22: #{tpu_custom_call.1} parent=11 // pred_check_branch
          %201 = sbr.rel (%p199) target = $region24
        $region23: #{tpu_custom_call.1} parent=11 // pred_region
          _
        $region24: #{tpu_custom_call.1} parent=11 // pred_fallthru
          _
        // Predicated region
        $region25: #{tpu_custom_call.1} parent=11 // pred_check
          %p202 = pneg %p126
        $region26: #{tpu_custom_call.1} parent=11 // pred_check_branch
          %204 = sbr.rel (%p202) target = $region28
        $region27: #{tpu_custom_call.1} parent=11 // pred_region
          _
        $region28: #{tpu_custom_call.1} parent=11 // pred_fallthru
          _
      $region12: #{tpu_custom_call.1} parent=5 // pred_fallthru
        _
      %p205 = scmp.lt.s32.totalorder %s16, 2
      // Predicated region
      $region29: #{tpu_custom_call.1} parent=5 // pred_check
        %p206 = pneg %p205
      $region30: #{tpu_custom_call.1} parent=5 // pred_check_branch
        %208 = sbr.rel (%p206) target = $region32
      $region31: #{tpu_custom_call.1} parent=5 // pred_region
        // Predicated region
        $region33: #{tpu_custom_call.1} parent=31 // pred_check
          %p209 = pneg %p36
        $region34: #{tpu_custom_call.1} parent=31 // pred_check_branch
          %211 = sbr.rel (%p209) target = $region36
        $region35: #{tpu_custom_call.1} parent=31 // pred_region
          %s212 = smul.u32 2, %s16
          %p213 = scmp.lt.s32.totalorder %s212, 3
          %s214 = scalar_select %p213, %s212, 3
          %s215 = smul.addr %s214, 8
          %s216 = scalar_lea.vmem %s0, %s215
          %s217 = smul.u32 2, %s16
        $region36: #{tpu_custom_call.1} parent=31 // pred_fallthru
          _
      $region32: #{tpu_custom_call.1} parent=5 // pred_fallthru
        _
      %p218 = scmp.le.s32.totalorder 1, %s16
      %p219 = scmp.lt.s32.totalorder %s16, 3
      %p220 = pnand %p218, %p219
      %p221 = pneg %p220
      // Predicated region
      $region37: #{tpu_custom_call.1} parent=5 // pred_check
        _
      $region38: #{tpu_custom_call.1} parent=5 // pred_check_branch
        %223 = sbr.rel (%p220) target = $region40
      $region39: #{tpu_custom_call.1} parent=5 // pred_region
        %s224 = ssub.s32 %s16, 1
        %s225 = smul.u32 2, %s21
        %p226 = scmp.lt.s32.totalorder %s225, 3
        %s227 = scalar_select %p226, %s225, 3
        %s228 = smul.addr %s227, 8
        %s229 = scalar_lea.vmem %s0, %s228
        %p230 = pneg %p42
        %p231 = pneg %p39
        %p232 = pneg %p63
        %p233 = pneg %p60
        %p234 = pneg %p84
        %p235 = pneg %p81
        %p236 = pneg %p105
        %p237 = pneg %p102
        %p238 = pneg %p126
        %p239 = pneg %p123
        %p240 = pneg %p152
        %p241 = pneg %p149
        %s242 = smul.u32 2, %s21
        %p243 = scmp.lt.s32.totalorder %s242, 3
        %s244 = scalar_select %p243, %s242, 3
        %s245 = smul.addr %s244, 8
        %s246 = scalar_lea.vmem %s5, %s245
        %p247 = pneg %p178
        %p248 = pneg %p175
        %s249 = sand.u32 %s165, 1
        %s250 = scalar_lea.sflag [#allocation3], %s249
        %s251 = sand.u32 %s165, 1
        %s252 = smul.addr %s251, 16
        %s253 = scalar_lea.vmem [#allocation2], %s252
        %s254 = smul.u32 2, %s21
        %p255 = scmp.lt.s32.totalorder %s254, 3
        %s256 = scalar_select %p255, %s254, 3
        %s257 = smul.addr %s256, 8
        %s258 = scalar_lea.vmem %s0, %s257
        %s259 = smul.u32 2, %s21
        %s260 = smul.u32 2, %s21
        %p261 = scmp.lt.s32.totalorder %s260, 3
        %s262 = scalar_select %p261, %s260, 3
        %s263 = smul.addr %s262, 8
        %s264 = scalar_lea.vmem %s5, %s263
        %s265 = smul.u32 2, %s21
        %s266 = smul.u32 2, %s21
        %v267 = vld [vmem:[%s258] sm:$0xff]
        %v268 = vld [vmem:[%s258 + $0x8] sm:$0xff]
        %v269 = vld [vmem:[%s1] sm:$0xff]
        %v270 = vld [vmem:[%s1 + $0x8] sm:$0xff]
        %v271 = vld [vmem:[%s1 + $0x10] sm:$0xff]
        %v272 = vld [vmem:[%s1 + $0x18] sm:$0xff]
        %v273 = vld [vmem:[%s2] sm:$0x1]
        %v275 = vlaneseq
        %v276 = vshrl.u32 %v275, 7
        %v277 = vsub.s32 0, %v276
        %v278 = vrot.slane %v273, %v277
        %vm280 = vcmask 261120
        %v282 = vsel %vm280, %v267, 0
        %v285 = vsel %vm280, %v268, 0
        %287 = vmatprep.subr.mxu0 0.0
        %288 = vmatpush1.msra.mxu0 %v269
        %289 = vmatprep.subr.mxu0 0.0
        %290 = vmatpush1.msra.mxu0 %v270
        %291 = vmatprep.subr.mxu0 0.0
        %292 = vmatpush1.msra.mxu0 %v271
        %293 = vmatprep.subr.mxu0 0.0
        %294 = vmatpush1.msra.mxu0 %v272
        %295 = vmatprep.subr.mxu0 0.0
        %296 = vmatpush1.msra.mxu0 0.0
        %297 = vmatprep.subr.mxu0 0.0
        %298 = vmatpush1.msra.mxu0 0.0
        %299 = vmatprep.subr.mxu0 0.0
        %300 = vmatpush1.msra.mxu0 0.0
        %301 = vmatprep.subr.mxu0 0.0
        %302 = vmatpush1.msra.mxu0 0.0
        %303 = vmatprep.subr.mxu0 0.0
        %304 = vmatpush1.msra.mxu0 0.0
        %305 = vmatprep.subr.mxu0 0.0
        %306 = vmatpush1.msra.mxu0 0.0
        %307 = vmatprep.subr.mxu0 0.0
        %308 = vmatpush1.msra.mxu0 0.0
        %309 = vmatprep.subr.mxu0 0.0
        %310 = vmatpush1.msra.mxu0 0.0
        %311 = vmatprep.subr.mxu0 0.0
        %312 = vmatpush1.msra.mxu0 0.0
        %313 = vmatprep.subr.mxu0 0.0
        %314 = vmatpush1.msra.mxu0 0.0
        %315 = vmatprep.subr.mxu0 0.0
        %316 = vmatpush1.msra.mxu0 0.0
        %317 = vmatprep.subr.mxu0 0.0
        %318 = vmatpush1.msra.mxu0 0.0
        %319 = vmatprep.subr.mxu0 0.0
        %320 = vmatpush1.msra.mxu0 0.0
        %321 = vmatprep.subr.mxu0 0.0
        %322 = vmatpush1.msra.mxu0 0.0
        %323 = vmatprep.subr.mxu0 0.0
        %324 = vmatpush1.msra.mxu0 0.0
        %325 = vmatprep.subr.mxu0 0.0
        %326 = vmatpush1.msra.mxu0 0.0
        %327 = vmatprep.subr.mxu0 0.0
        %328 = vmatpush1.msra.mxu0 0.0
        %329 = vmatprep.subr.mxu0 0.0
        %330 = vmatpush1.msra.mxu0 0.0
        %331 = vmatprep.subr.mxu0 0.0
        %332 = vmatpush1.msra.mxu0 0.0
        %333 = vmatprep.subr.mxu0 0.0
        %334 = vmatpush1.msra.mxu0 0.0
        %335 = vmatprep.subr.mxu0 0.0
        %336 = vmatpush1.msra.mxu0 0.0
        %337 = vmatprep.subr.mxu0 0.0
        %338 = vmatpush1.msra.mxu0 0.0
        %339 = vmatprep.subr.mxu0 0.0
        %340 = vmatpush1.msra.mxu0 0.0
        %341 = vmatprep.subr.mxu0 0.0
        %342 = vmatpush1.msra.mxu0 0.0
        %343 = vmatprep.subr.mxu0 0.0
        %344 = vmatpush1.msra.mxu0 0.0
        %345 = vmatprep.subr.mxu0 0.0
        %346 = vmatpush1.msra.mxu0 0.0
        %347 = vmatprep.subr.mxu0 0.0
        %348 = vmatpush1.msra.mxu0 0.0
        %349 = vmatprep.subr.mxu0 0.0
        %350 = vmatpush1.msra.mxu0 0.0
        %351 = vmatprep.mubr.f32.mxu0 0.0
        %352 = vmatmul.mubr.f32.gmra.mrb[0].mxu0 %v282
        %v353 = vpop.f32.mrb[0].mxu0
        %v354 = vadd.f32 %v278, %v353
        %v355 = vpop.f32.mrb[0].mxu0
        %356 = vmatprep.mubr.f32.mxu0 0.0
        %357 = vmatmul.mubr.f32.gmra.mrb[0].mxu0 %v285
        %v358 = vpop.f32.mrb[0].mxu0
        %v359 = vadd.f32 %v278, %v358
        %v360 = vpop.f32.mrb[0].mxu0
        %361 = vdwg.mxu0
        %v362 = vmax.f32 %v354, 0.0
        %v363 = vmax.f32 %v359, 0.0
        %vm364 = vcmask 523264
        %365 = vst.msk [vmem:[%s253] sm:$0xff] %vm364, %v362
        %366 = vst.msk [vmem:[%s253 + $0x8] sm:$0xff] %vm364, %v363
        %v367 = vld [vmem:[%s3] sm:$0xff]
        %v368 = vld [vmem:[%s3 + $0x8] sm:$0xff]
        %v369 = vld [vmem:[%s3 + $0x10] sm:$0xff]
        %v370 = vld [vmem:[%s3 + $0x18] sm:$0xff]
        %v371 = vld [vmem:[%s3 + $0x20] sm:$0xff]
        %v372 = vld [vmem:[%s3 + $0x28] sm:$0xff]
        %v373 = vld [vmem:[%s3 + $0x30] sm:$0xff]
        %v374 = vld [vmem:[%s3 + $0x38] sm:$0xff]
        %v375 = vld [vmem:[%s4] sm:$0x1]
        %v377 = vlaneseq
        %v378 = vshrl.u32 %v377, 7
        %v379 = vsub.s32 0, %v378
        %v380 = vrot.slane %v375, %v379
        %v383 = vsel %vm364, %v362, 0
        %v386 = vsel %vm364, %v363, 0
        %388 = vmatprep.subr.mxu0 0.0
        %389 = vmatpush1.msra.mxu0 %v367
        %390 = vmatprep.subr.mxu0 0.0
        %391 = vmatpush1.msra.mxu0 %v368
        %392 = vmatprep.subr.mxu0 0.0
        %393 = vmatpush1.msra.mxu0 %v369
        %394 = vmatprep.subr.mxu0 0.0
        %395 = vmatpush1.msra.mxu0 %v370
        %396 = vmatprep.subr.mxu0 0.0
        %397 = vmatpush1.msra.mxu0 %v371
        %398 = vmatprep.subr.mxu0 0.0
        %399 = vmatpush1.msra.mxu0 %v372
        %400 = vmatprep.subr.mxu0 0.0
        %401 = vmatpush1.msra.mxu0 %v373
        %402 = vmatprep.subr.mxu0 0.0
        %403 = vmatpush1.msra.mxu0 %v374
        %404 = vmatprep.subr.mxu0 0.0
        %405 = vmatpush1.msra.mxu0 0.0
        %406 = vmatprep.subr.mxu0 0.0
        %407 = vmatpush1.msra.mxu0 0.0
        %408 = vmatprep.subr.mxu0 0.0
        %409 = vmatpush1.msra.mxu0 0.0
        %410 = vmatprep.subr.mxu0 0.0
        %411 = vmatpush1.msra.mxu0 0.0
        %412 = vmatprep.subr.mxu0 0.0
        %413 = vmatpush1.msra.mxu0 0.0
        %414 = vmatprep.subr.mxu0 0.0
        %415 = vmatpush1.msra.mxu0 0.0
        %416 = vmatprep.subr.mxu0 0.0
        %417 = vmatpush1.msra.mxu0 0.0
        %418 = vmatprep.subr.mxu0 0.0
        %419 = vmatpush1.msra.mxu0 0.0
        %420 = vmatprep.subr.mxu0 0.0
        %421 = vmatpush1.msra.mxu0 0.0
        %422 = vmatprep.subr.mxu0 0.0
        %423 = vmatpush1.msra.mxu0 0.0
        %424 = vmatprep.subr.mxu0 0.0
        %425 = vmatpush1.msra.mxu0 0.0
        %426 = vmatprep.subr.mxu0 0.0
        %427 = vmatpush1.msra.mxu0 0.0
        %428 = vmatprep.subr.mxu0 0.0
        %429 = vmatpush1.msra.mxu0 0.0
        %430 = vmatprep.subr.mxu0 0.0
        %431 = vmatpush1.msra.mxu0 0.0
        %432 = vmatprep.subr.mxu0 0.0
        %433 = vmatpush1.msra.mxu0 0.0
        %434 = vmatprep.subr.mxu0 0.0
        %435 = vmatpush1.msra.mxu0 0.0
        %436 = vmatprep.subr.mxu0 0.0
        %437 = vmatpush1.msra.mxu0 0.0
        %438 = vmatprep.subr.mxu0 0.0
        %439 = vmatpush1.msra.mxu0 0.0
        %440 = vmatprep.subr.mxu0 0.0
        %441 = vmatpush1.msra.mxu0 0.0
        %442 = vmatprep.subr.mxu0 0.0
        %443 = vmatpush1.msra.mxu0 0.0
        %444 = vmatprep.subr.mxu0 0.0
        %445 = vmatpush1.msra.mxu0 0.0
        %446 = vmatprep.subr.mxu0 0.0
        %447 = vmatpush1.msra.mxu0 0.0
        %448 = vmatprep.subr.mxu0 0.0
        %449 = vmatpush1.msra.mxu0 0.0
        %450 = vmatprep.subr.mxu0 0.0
        %451 = vmatpush1.msra.mxu0 0.0
        %452 = vmatprep.mubr.f32.mxu0 0.0
        %453 = vmatmul.mubr.f32.gmra.mrb[0].mxu0 %v383
        %v454 = vpop.f32.mrb[0].mxu0
        %v455 = vadd.f32 %v380, %v454
        %v456 = vpop.f32.mrb[0].mxu0
        %457 = vmatprep.mubr.f32.mxu0 0.0
        %458 = vmatmul.mubr.f32.gmra.mrb[0].mxu0 %v386
        %v459 = vpop.f32.mrb[0].mxu0
        %v460 = vadd.f32 %v380, %v459
        %v461 = vpop.f32.mrb[0].mxu0
        %462 = vdwg.mxu0
        %vm463 = vcmask 80896
        %464 = vst.msk [vmem:[%s264] sm:$0xff] %vm463, %v455
        %465 = vst.msk [vmem:[%s264 + $0x8] sm:$0xff] %vm463, %v460
        %s466 = smul.u32 2, %s21
        %p467 = scmp.lt.s32.totalorder %s466, 3
        %s468 = scalar_select %p467, %s466, 3
        %s469 = smul.addr %s468, 8
        %s470 = scalar_lea.vmem %s5, %s469
        %s471 = sand.u32 %s165, 1
        %s472 = scalar_lea.sflag [#allocation3], %s471
        %s473 = sand.u32 %s165, 1
        %s474 = smul.addr %s473, 16
        %s475 = scalar_lea.vmem [#allocation2], %s474
        // Predicated region
        $region41: #{tpu_custom_call.1} parent=39 // pred_check
          %p476 = pneg %p149
        $region42: #{tpu_custom_call.1} parent=39 // pred_check_branch
          %478 = sbr.rel (%p476) target = $region44
        $region43: #{tpu_custom_call.1} parent=39 // pred_region
          %s479 = smul.u32 2, %s21
        $region44: #{tpu_custom_call.1} parent=39 // pred_fallthru
          _
        // Predicated region
        $region45: #{tpu_custom_call.1} parent=39 // pred_check
          %p480 = pneg %p175
        $region46: #{tpu_custom_call.1} parent=39 // pred_check_branch
          %482 = sbr.rel (%p480) target = $region48
        $region47: #{tpu_custom_call.1} parent=39 // pred_region
          %s483 = smul.u32 2, %s21
          %s485 = ssub.s32 256, 256
          %486 = vsyncadd %s472, %s485
          %s487 = smul.addr %s483, 128
          %s488 = scalar_lea.hbm %s6, %s487
          %s489 = sshll.u32 %s475, 4
          %s490 = int_to_ptr.vmem [resolvable:$true] %s489
          %495 = dma.vmem_to_hbm [thread:$0]  %s490, 256, %s488, %s472, 128, 128, 8
        $region48: #{tpu_custom_call.1} parent=39 // pred_fallthru
          _
      $region40: #{tpu_custom_call.1} parent=5 // pred_fallthru
        _
      %p496 = scmp.le.s32.totalorder 2, %s16
      // Predicated region
      $region49: #{tpu_custom_call.1} parent=5 // pred_check
        %p497 = pneg %p496
      $region50: #{tpu_custom_call.1} parent=5 // pred_check_branch
        %499 = sbr.rel (%p497) target = $region52
      $region51: #{tpu_custom_call.1} parent=5 // pred_region
        %s500 = ssub.s32 %s16, 2
        // Predicated region
        $region53: #{tpu_custom_call.1} parent=51 // pred_check
          %p501 = pneg %p155
        $region54: #{tpu_custom_call.1} parent=51 // pred_check_branch
          %503 = sbr.rel (%p501) target = $region56
        $region55: #{tpu_custom_call.1} parent=51 // pred_region
          %s504 = smul.u32 2, %s22
          %p505 = scmp.lt.s32.totalorder %s504, 3
          %s506 = scalar_select %p505, %s504, 3
          %s507 = smul.addr %s506, 8
          %s508 = scalar_lea.vmem %s5, %s507
        $region56: #{tpu_custom_call.1} parent=51 // pred_fallthru
          _
        // Predicated region
        $region57: #{tpu_custom_call.1} parent=51 // pred_check
          %p509 = pneg %p181
        $region58: #{tpu_custom_call.1} parent=51 // pred_check_branch
          %511 = sbr.rel (%p509) target = $region60
        $region59: #{tpu_custom_call.1} parent=51 // pred_region
          %s512 = sand.u32 %s166, 1
          %s513 = scalar_lea.sflag [#allocation3], %s512
          %s514 = sand.u32 %s166, 1
          %s515 = smul.addr %s514, 16
          %s516 = scalar_lea.vmem [#allocation2], %s515
          %517 = dma.done %s513, 256
        $region60: #{tpu_custom_call.1} parent=51 // pred_fallthru
          _
      $region52: #{tpu_custom_call.1} parent=5 // pred_fallthru
        _
    $region6: #{tpu_custom_call.1} parent=1 // loop_footer
      %s20 = sadd.s32 1, %s16
    $region7: #{tpu_custom_call.1} parent=1 // loop_footer_branch
      %15 = sbr.rel target = $region3
    $region8: #{tpu_custom_call.1} parent=1 // loop_exit
      _
    %518 = vsyncpa [#allocation3], 1
    %s519 = scalar_lea.sflag [#allocation3], 1
    %520 = vsyncpa %s519, 1

</llo_original>
